<compile_context>
chip_gen: v7x
topology: tpu7x:2x2x1
jax: 0.10.0
libtpu: 0.0.40
codegen_flags: <defaults>
</compile_context>

<pallas_src>
import functools

import jax
import jax.numpy as jnp
from jax import lax
from jax.experimental import pallas as pl
from jax.experimental.pallas import tpu as pltpu

_LANES = 128
_SUBLANES = 8
_ALIGN = _SUBLANES * _LANES            # 1024 elements (one f32 vreg)
_TILE_ROWS_CAP = 8192                  # 8192 * 128 * 4 B = 4 MiB per f32 block
_CHUNK_ROWS = 256                      # 128 KiB f32 per operand sub-chunk
_VMEM_LIMIT_BYTES = 40 * 1024 * 1024

# Chips whose Pallas core exposes a single TensorCore: a size-2 'parallel' axis
# would just be a serial outer loop there (extra reset/writeback and possibly a
# wasted block), so use one shard.  Unknown / v7x / megacore chips get 2.
_SINGLE_TC_TAGS = ("lite", "v5e", "v6e", "v2", "v3")


def _max_shards():
    try:
        kind = jax.devices()[0].device_kind.lower()
    except Exception:
        return 1
    if any(tag in kind for tag in _SINGLE_TC_TAGS):
        return 1
    return 2


def _chunk_absdiff(o_ref, t_ref, m_ref, r0, nrows, row0_global, rows):
    """|o - t| (optionally * (1 - m)) for rows [r0, r0+nrows) of the block.

    If `row0_global` is given (partial / overshoot block), rows whose global
    index is >= `rows` are zeroed with a select, so unspecified data in the
    padded edge region can never contribute (even if it is NaN/inf)."""
    o = o_ref[pl.ds(r0, nrows), :].astype(jnp.float32)
    t = t_ref[pl.ds(r0, nrows), :].astype(jnp.float32)
    d = o - t
    if m_ref is not None:
        keep = 1.0 - m_ref[pl.ds(r0, nrows), :].astype(jnp.float32)
        d = d * keep
    d = jnp.abs(d)
    if row0_global is not None:
        local = lax.broadcasted_iota(jnp.int32, (nrows, _LANES), 0)
        d = jnp.where((row0_global + r0 + local) < rows, d, 0.0)
    return d


def _block_partial_sum(o_ref, t_ref, m_ref, nrows, row0_global=None, rows=None):
    """(8,128) f32 partial sums of the L1 term over an nrows-row block.

    nrows is static and a multiple of 8 (the wrapper aligns the flat view to
    8*128 elements).  Work is chunked so intermediates stay a few dozen vregs."""
    acc = jnp.zeros((_SUBLANES, _LANES), jnp.float32)

    def add_chunk(a, r0, cn):
        d = _chunk_absdiff(o_ref, t_ref, m_ref, r0, cn, row0_global, rows)
        return a + d.reshape(-1, _SUBLANES, _LANES).sum(axis=0)

    n_chunks = nrows // _CHUNK_ROWS
    if n_chunks > 0:
        def body(c, a):
            r0 = pl.multiple_of(c * _CHUNK_ROWS, _CHUNK_ROWS)
            return add_chunk(a, r0, _CHUNK_ROWS)
        acc = lax.fori_loop(0, n_chunks, body, acc, unroll=True)

    rem = nrows - n_chunks * _CHUNK_ROWS            # multiple of 8, < 256
    if rem:
        acc = add_chunk(acc, n_chunks * _CHUNK_ROWS, rem)
    return acc


def _recon_kernel(*refs, rows, tile_rows, num_shards, masked):
    if masked:
        o_ref, t_ref, m_ref, out_ref = refs
    else:
        o_ref, t_ref, out_ref = refs
        m_ref = None

    i = pl.program_id(1)

    @pl.when(i == 0)
    def _():
        out_ref[...] = jnp.zeros((_SUBLANES, _LANES), jnp.float32)

    # Unclamped block index for this step (interleaved-by-parity sharding).
    idx = pl.program_id(0) + num_shards * i
    row0 = idx * tile_rows
    is_full = row0 + tile_rows <= rows      # full, in-range block -> mask-free

    @pl.when(is_full)
    def _():
        out_ref[...] += _block_partial_sum(o_ref, t_ref, m_ref, tile_rows)

    @pl.when(jnp.logical_not(is_full))
    def _():
        # Partial last block or shard-overshoot block: validity-masked path.
        out_ref[...] += _block_partial_sum(o_ref, t_ref, m_ref, tile_rows,
                                           row0_global=row0, rows=rows)


def _split_body_tail(x):
    """Flat view split into an (8*128)-aligned (rows,128) body (no copy when
    already aligned) and a <1024-element ragged tail handled in the wrapper."""
    flat = x.reshape(-1)
    n_body = (flat.shape[0] // _ALIGN) * _ALIGN
    body = flat[:n_body].reshape(-1, _LANES)
    tail = flat[n_body:]
    return body, tail


def _tail_term(o_tail, t_tail, m_tail):
    d = o_tail.astype(jnp.float32) - t_tail.astype(jnp.float32)
    if m_tail is not None:
        d = d * (1.0 - m_tail.astype(jnp.float32))
    return jnp.sum(jnp.abs(d))


def recon_loss(data_input, model_output, *, reduction="mean", masked=False):
    """Pallas implementation of ReconLoss.forward (L1 loss, 'mean' reduction)."""
    assert reduction == "mean", "only 'mean' reduction implemented"
    outputs = model_output["outputs"]
    targets = data_input["targets"]
    masks = data_input["masks"] if masked else None
    total_elems = outputs.size       # PyTorch L1Loss('mean') divides by ALL elems.

    o_body, o_tail = _split_body_tail(outputs)
    t_body, t_tail = _split_body_tail(targets)
    m_body = m_tail = None
    if masked:
        m_body, m_tail = _split_body_tail(masks)

    rows = o_body.shape[0]
    body_sum = jnp.zeros((), jnp.float32)

    if rows > 0:
        tile_rows = min(rows, _TILE_ROWS_CAP)
        num_blocks = pl.cdiv(rows, tile_rows)
        num_shards = min(_max_shards(), num_blocks)
        blocks_per_shard = pl.cdiv(num_blocks, num_shards)

        def in_map(p, i):
            idx = p + num_shards * i
            # Overshoot steps re-use the shard's previous block index, so the
            # pipeline issues no new HBM fetch; the kernel masks them to zero.
            safe = jnp.where(idx < num_blocks, idx, idx - num_shards)
            return (safe, 0)

        row_spec = pl.BlockSpec((tile_rows, _LANES), in_map)
        out_spec = pl.BlockSpec((None, _SUBLANES, _LANES), lambda p, i: (p, 0, 0))

        kernel = functools.partial(
            _recon_kernel, rows=rows, tile_rows=tile_rows,
            num_shards=num_shards, masked=masked)

        if masked:
            in_specs = [row_spec, row_spec, row_spec]
            args = (o_body, t_body, m_body)
        else:
            in_specs = [row_spec, row_spec]
            args = (o_body, t_body)

        partials = pl.pallas_call(
            kernel,
            out_shape=jax.ShapeDtypeStruct(
                (num_shards, _SUBLANES, _LANES), jnp.float32),
            grid_spec=pltpu.PrefetchScalarGridSpec(
                num_scalar_prefetch=0,
                grid=(num_shards, blocks_per_shard),
                in_specs=in_specs,
                out_specs=out_spec,
            ),
            compiler_params=pltpu.CompilerParams(
                dimension_semantics=("parallel", "arbitrary"),
                vmem_limit_bytes=_VMEM_LIMIT_BYTES,
            ),
        )(*args)
        body_sum = jnp.sum(partials)

    if o_tail.shape[0]:
        body_sum = body_sum + _tail_term(o_tail, t_tail, m_tail)

    return body_sum / total_elems


if __name__ == "__main__":
    key = jax.random.PRNGKey(0)
    k1, k2, k3, k4, k5, k6 = jax.random.split(key, 6)

    # --- Small NCHW case (matches the module's typical image inputs). ---
    x_shape = (2, 4, 16, 16)
    outputs = jax.random.normal(k1, x_shape, dtype=jnp.float32)
    targets = jax.random.normal(k2, x_shape, dtype=jnp.float32)
    masks = (jax.random.uniform(k3, x_shape) > 0.5).astype(jnp.float32)
    data_input = {"targets": targets, "masks": masks}
    model_output = {"outputs": outputs}

    loss = recon_loss(data_input, model_output, masked=False)
    jax.block_until_ready(loss)
    ref = jnp.mean(jnp.abs(outputs - targets))
    assert jnp.allclose(loss, ref, rtol=1e-5, atol=1e-5), (loss, ref)

    loss_m = recon_loss(data_input, model_output, masked=True)
    jax.block_until_ready(loss_m)
    ref_m = jnp.mean(jnp.abs(outputs * (1 - masks) - targets * (1 - masks)))
    assert jnp.allclose(loss_m, ref_m, rtol=1e-5, atol=1e-5), (loss_m, ref_m)

    # --- Odd-sized bf16 case (ragged wrapper tail + in-kernel f32 cast). ---
    y_shape = (2, 3, 17, 19)
    o_bf = jax.random.normal(k4, y_shape, dtype=jnp.float32).astype(jnp.bfloat16)
    t_bf = jax.random.normal(k5, y_shape, dtype=jnp.float32).astype(jnp.bfloat16)
    loss_bf = recon_loss({"targets": t_bf}, {"outputs": o_bf}, masked=False)
    jax.block_until_ready(loss_bf)
    ref_bf = jnp.mean(jnp.abs(o_bf.astype(jnp.float32) - t_bf.astype(jnp.float32)))
    assert jnp.allclose(loss_bf, ref_bf, rtol=1e-4, atol=1e-4), (loss_bf, ref_bf)

    # --- Multi-block case: 16640 rows -> 3 blocks (2 full + 1 partial edge),
    #     exercises interleaved shards / clamped overshoot where applicable. ---
    z_shape = (16, 8, 128, 130)
    o_big = jax.random.normal(k6, z_shape, dtype=jnp.float32)
    t_big = jax.random.normal(k1, z_shape, dtype=jnp.float32)
    m_big = (jax.random.uniform(k2, z_shape) > 0.5).astype(jnp.float32)
    big_in = {"targets": t_big, "masks": m_big}
    big_out = {"outputs": o_big}

    loss_big = recon_loss(big_in, big_out, masked=False)
    jax.block_until_ready(loss_big)
    ref_big = jnp.mean(jnp.abs(o_big - t_big))
    assert jnp.allclose(loss_big, ref_big, rtol=1e-4, atol=1e-4), (loss_big, ref_big)

    loss_big_m = recon_loss(big_in, big_out, masked=True)
    jax.block_until_ready(loss_big_m)
    ref_big_m = jnp.mean(jnp.abs(o_big * (1 - m_big) - t_big * (1 - m_big)))
    assert jnp.allclose(loss_big_m, ref_big_m, rtol=1e-4, atol=1e-4), (
        loss_big_m, ref_big_m)

    print("KERNEL_OK")
</pallas_src>

<mosaic_0001>
module attributes {stable_mosaic.version = 11 : i64} {
  func.func @_recon_kernel(%arg0: i32, %arg1: i32, %arg2: memref<16x128xf32, #tpu.memory_space<vmem>>, %arg3: memref<16x128xf32, #tpu.memory_space<vmem>>, %arg4: memref<1x8x128xf32, #tpu.memory_space<vmem>>) attributes {dimension_semantics = [#tpu.dimension_semantics<parallel>, #tpu.dimension_semantics<arbitrary>], iteration_bounds = array<i64: 1, 1>, scalar_prefetch = 0 : i64, scratch_operands = 0 : i64, tpu.core_type = #tpu.core_type<tc>, window_params = [{transform_indices = @transform_0, window_bounds = array<i64: 16, 128>}, {transform_indices = @transform_1, window_bounds = array<i64: 16, 128>}, {transform_indices = @transform_2, window_bounds = array<i64: 1, 8, 128>}]} {
    %c0_i32 = arith.constant 0 : i32
    %0 = arith.cmpi eq, %arg1, %c0_i32 : i32
    %1 = arith.extui %0 : i1 to i32
    %c0_i32_0 = arith.constant 0 : i32
    %2 = arith.cmpi ne, %1, %c0_i32_0 : i32
    scf.if %2 {
      %cst = arith.constant 0.000000e+00 : f32
      %13 = vector.broadcast %cst : f32 to vector<8x128xf32>
      %c0 = arith.constant 0 : index
      %c0_5 = arith.constant 0 : index
      %c0_6 = arith.constant 0 : index
      %14 = vector.load %arg4[%c0, %c0_5, %c0_6] : memref<1x8x128xf32, #tpu.memory_space<vmem>>, vector<1x8x128xf32>
      %15 = vector.shape_cast %14 : vector<1x8x128xf32> to vector<8x128xf32>
      %16 = vector.shape_cast %13 : vector<8x128xf32> to vector<1x8x128xf32>
      tpu.vector_store %arg4[%c0, %c0_5, %c0_6], %16 {strides = array<i32>} : memref<1x8x128xf32, #tpu.memory_space<vmem>>, vector<1x8x128xf32>,
    } else {
    }
    %c1_i32 = arith.constant 1 : i32
    %3 = arith.muli %c1_i32, %arg1 : i32
    %4 = arith.addi %arg0, %3 : i32
    %c16_i32 = arith.constant 16 : i32
    %5 = arith.muli %4, %c16_i32 : i32
    %c16_i32_1 = arith.constant 16 : i32
    %6 = arith.addi %5, %c16_i32_1 : i32
    %c16_i32_2 = arith.constant 16 : i32
    %7 = arith.cmpi sle, %6, %c16_i32_2 : i32
    %8 = arith.extui %7 : i1 to i32
    %c0_i32_3 = arith.constant 0 : i32
    %9 = arith.cmpi ne, %8, %c0_i32_3 : i32
    scf.if %9 {
      %c0 = arith.constant 0 : index
      %c0_5 = arith.constant 0 : index
      %c0_6 = arith.constant 0 : index
      %13 = vector.load %arg4[%c0, %c0_5, %c0_6] : memref<1x8x128xf32, #tpu.memory_space<vmem>>, vector<1x8x128xf32>
      %14 = vector.shape_cast %13 : vector<1x8x128xf32> to vector<8x128xf32>
      %cst = arith.constant 0.000000e+00 : f32
      %15 = vector.broadcast %cst : f32 to vector<8x128xf32>
      %c0_7 = arith.constant 0 : index
      %c0_8 = arith.constant 0 : index
      %16 = vector.load %arg2[%c0_7, %c0_8] : memref<16x128xf32, #tpu.memory_space<vmem>>, vector<16x128xf32>
      %c0_9 = arith.constant 0 : index
      %c0_10 = arith.constant 0 : index
      %17 = vector.load %arg3[%c0_9, %c0_10] : memref<16x128xf32, #tpu.memory_space<vmem>>, vector<16x128xf32>
      %18 = arith.subf %16, %17 : vector<16x128xf32>
      %19 = math.absf %18 : vector<16x128xf32>
      %20 = vector.shape_cast %19 : vector<16x128xf32> to vector<2x8x128xf32>
      %cst_11 = arith.constant dense<0.000000e+00> : vector<8x128xf32>
      %21 = vector.multi_reduction <add>, %20, %cst_11 [0] : vector<2x8x128xf32> to vector<8x128xf32>
      %22 = arith.addf %15, %21 : vector<8x128xf32>
      %23 = arith.addf %14, %22 : vector<8x128xf32>
      %c0_12 = arith.constant 0 : index
      %c0_13 = arith.constant 0 : index
      %c0_14 = arith.constant 0 : index
      %24 = vector.load %arg4[%c0_12, %c0_13, %c0_14] : memref<1x8x128xf32, #tpu.memory_space<vmem>>, vector<1x8x128xf32>
      %25 = vector.shape_cast %24 : vector<1x8x128xf32> to vector<8x128xf32>
      %26 = vector.shape_cast %23 : vector<8x128xf32> to vector<1x8x128xf32>
      tpu.vector_store %arg4[%c0_12, %c0_13, %c0_14], %26 {strides = array<i32>} : memref<1x8x128xf32, #tpu.memory_space<vmem>>, vector<1x8x128xf32>,
    } else {
    }
    %true = arith.constant true
    %10 = arith.xori %7, %true : i1
    %11 = arith.extui %10 : i1 to i32
    %c0_i32_4 = arith.constant 0 : i32
    %12 = arith.cmpi ne, %11, %c0_i32_4 : i32
    scf.if %12 {
      %c0 = arith.constant 0 : index
      %c0_5 = arith.constant 0 : index
      %c0_6 = arith.constant 0 : index
      %13 = vector.load %arg4[%c0, %c0_5, %c0_6] : memref<1x8x128xf32, #tpu.memory_space<vmem>>, vector<1x8x128xf32>
      %14 = vector.shape_cast %13 : vector<1x8x128xf32> to vector<8x128xf32>
      %cst = arith.constant 0.000000e+00 : f32
      %15 = vector.broadcast %cst : f32 to vector<8x128xf32>
      %c0_7 = arith.constant 0 : index
      %c0_8 = arith.constant 0 : index
      %16 = vector.load %arg2[%c0_7, %c0_8] : memref<16x128xf32, #tpu.memory_space<vmem>>, vector<16x128xf32>
      %c0_9 = arith.constant 0 : index
      %c0_10 = arith.constant 0 : index
      %17 = vector.load %arg3[%c0_9, %c0_10] : memref<16x128xf32, #tpu.memory_space<vmem>>, vector<16x128xf32>
      %18 = arith.subf %16, %17 : vector<16x128xf32>
      %19 = math.absf %18 : vector<16x128xf32>
      %20 = tpu.iota {dimensions = array<i32: 0>} : vector<16x128xi32>
      %c0_i32_11 = arith.constant 0 : i32
      %21 = arith.addi %5, %c0_i32_11 : i32
      %22 = vector.broadcast %21 : i32 to vector<16x128xi32>
      %23 = arith.addi %22, %20 : vector<16x128xi32>
      %c16_i32_12 = arith.constant 16 : i32
      %24 = vector.broadcast %c16_i32_12 : i32 to vector<16x128xi32>
      %25 = arith.cmpi slt, %23, %24 : vector<16x128xi32>
      %cst_13 = arith.constant 0.000000e+00 : f32
      %26 = vector.broadcast %cst_13 : f32 to vector<16x128xf32>
      %27 = arith.select %25, %19, %26 : vector<16x128xi1>, vector<16x128xf32>
      %28 = vector.shape_cast %27 : vector<16x128xf32> to vector<2x8x128xf32>
      %cst_14 = arith.constant dense<0.000000e+00> : vector<8x128xf32>
      %29 = vector.multi_reduction <add>, %28, %cst_14 [0] : vector<2x8x128xf32> to vector<8x128xf32>
      %30 = arith.addf %15, %29 : vector<8x128xf32>
      %31 = arith.addf %14, %30 : vector<8x128xf32>
      %c0_15 = arith.constant 0 : index
      %c0_16 = arith.constant 0 : index
      %c0_17 = arith.constant 0 : index
      %32 = vector.load %arg4[%c0_15, %c0_16, %c0_17] : memref<1x8x128xf32, #tpu.memory_space<vmem>>, vector<1x8x128xf32>
      %33 = vector.shape_cast %32 : vector<1x8x128xf32> to vector<8x128xf32>
      %34 = vector.shape_cast %31 : vector<8x128xf32> to vector<1x8x128xf32>
      tpu.vector_store %arg4[%c0_15, %c0_16, %c0_17], %34 {strides = array<i32>} : memref<1x8x128xf32, #tpu.memory_space<vmem>>, vector<1x8x128xf32>,
    } else {
    }
    return
  }
  func.func @transform_0(%arg0: i32, %arg1: i32) -> (i32, i32) {
    %c1_i32 = arith.constant 1 : i32
    %0 = arith.muli %c1_i32, %arg1 : i32
    %1 = arith.addi %arg0, %0 : i32
    %c1_i32_0 = arith.constant 1 : i32
    %2 = arith.cmpi slt, %1, %c1_i32_0 : i32
    %c1_i32_1 = arith.constant 1 : i32
    %3 = arith.subi %1, %c1_i32_1 : i32
    %4 = arith.select %2, %1, %3 : i32
    %c0_i32 = arith.constant 0 : i32
    %c0_i32_2 = arith.constant 0 : i32
    return %4, %c0_i32 : i32, i32
  }
  func.func @transform_1(%arg0: i32, %arg1: i32) -> (i32, i32) {
    %c1_i32 = arith.constant 1 : i32
    %0 = arith.muli %c1_i32, %arg1 : i32
    %1 = arith.addi %arg0, %0 : i32
    %c1_i32_0 = arith.constant 1 : i32
    %2 = arith.cmpi slt, %1, %c1_i32_0 : i32
    %c1_i32_1 = arith.constant 1 : i32
    %3 = arith.subi %1, %c1_i32_1 : i32
    %4 = arith.select %2, %1, %3 : i32
    %c0_i32 = arith.constant 0 : i32
    %c0_i32_2 = arith.constant 0 : i32
    return %4, %c0_i32 : i32, i32
  }
  func.func @transform_2(%arg0: i32, %arg1: i32) -> (i32, i32, i32) {
    %c0_i32 = arith.constant 0 : i32
    %c0_i32_0 = arith.constant 0 : i32
    %c0_i32_1 = arith.constant 0 : i32
    return %arg0, %c0_i32, %c0_i32_0 : i32, i32, i32
  }
}

</mosaic_0001>

<llo_original>
// kernel: tpu_custom_call.1
$region0: #{tpu_custom_call.1}
  #allocation0 [shape = 'u32[]', space=smem, size = 0x4, offset = 0x4, fixed_abs, tag = 'smem constant byte address 0x4 - core index']
  #allocation1 [shape = 'u32[144,128]{1,0:T(1,128)}', space=vmem, size = 0x12000, scoped, tag = 'internal scratch']
  %s0 = inlined_call_operand.hbm [shape: f32[16,128], index: 0, kind: input, shape index: {}]
  %s1 = inlined_call_operand.hbm [shape: f32[16,128], index: 1, kind: input, shape index: {}]
  %s2 = inlined_call_operand.hbm [shape: f32[1,8,128], index: 2, kind: output, shape index: {}]
  %s3 = sld [smem:[#allocation0]]
  $region38: #{tpu_custom_call.1} parent=0
    _
  %s5 = ssub.s32 1, %s3
  %s6 = scalar_select 0, %s5, %s3
  $region1: #{tpu_custom_call.1} parent=0
    #allocation2 [shape = 'u8[8192]{0}', space=vmem, size = 0x2000, scoped, tag = 'input window, operand 0, single buffered']
    #allocation3 [shape = 's32[1]{0}', space=sflag, size = 0x4, scoped, tag = 'scoped memory for tpu_custom_call.1']
    #allocation4 [shape = 's32[1]{0}', space=sflag, size = 0x4, scoped, tag = 'scoped memory for tpu_custom_call.1']
    #allocation5 [shape = 'u8[8192]{0}', space=vmem, size = 0x2000, scoped, tag = 'input window, operand 1, single buffered']
    #allocation6 [shape = 's32[1]{0}', space=sflag, size = 0x4, scoped, tag = 'scoped memory for tpu_custom_call.1']
    #allocation7 [shape = 'u8[4096]{0}', space=vmem, size = 0x1000, scoped, tag = 'output window, operand 0, single buffered']
    %7 = vsyncpa [#allocation3], 0
    %8 = vsyncpa [#allocation6], 0
    %9 = vsyncpa [#allocation4], 0
    // Predicated region
    $region2: #{tpu_custom_call.1} parent=1 // pred_check
      _
    $region3: #{tpu_custom_call.1} parent=1 // pred_check_branch
      %11 = sbr.rel (0) target = $region5
    $region4: #{tpu_custom_call.1} parent=1 // pred_region
      %s12 = sadd.s32 0, 0
      %p13 = scmp.lt.s32.totalorder %s12, 1
      %s14 = ssub.s32 %s12, 1
      %s15 = scalar_select %p13, %s12, %s14
      %s16 = smul.u32 2, %s15
      %s18 = ssub.s32 256, 256
      %19 = vsyncadd [#allocation3], %s18
      %s20 = smul.addr %s16, 128
      %s21 = scalar_lea.hbm %s0, %s20
      %s22 = sshll.u32 [#allocation2], 4
      %s23 = int_to_ptr.vmem [resolvable:$true] %s22
      %28 = dma.hbm_to_vmem [thread:$0]  %s21, 256, %s23, [#allocation3], 128, 128, 8
    $region5: #{tpu_custom_call.1} parent=1 // pred_fallthru
      _
    // Predicated region
    $region6: #{tpu_custom_call.1} parent=1 // pred_check
      _
    $region7: #{tpu_custom_call.1} parent=1 // pred_check_branch
      %30 = sbr.rel (0) target = $region9
    $region8: #{tpu_custom_call.1} parent=1 // pred_region
      %s31 = sadd.s32 0, 0
      %p32 = scmp.lt.s32.totalorder %s31, 1
      %s33 = ssub.s32 %s31, 1
      %s34 = scalar_select %p32, %s31, %s33
      %s35 = smul.u32 2, %s34
      %s37 = ssub.s32 256, 256
      %38 = vsyncadd [#allocation6], %s37
      %s39 = smul.addr %s35, 128
      %s40 = scalar_lea.hbm %s1, %s39
      %s41 = sshll.u32 [#allocation5], 4
      %s42 = int_to_ptr.vmem [resolvable:$true] %s41
      %47 = dma.hbm_to_vmem [thread:$0]  %s40, 256, %s42, [#allocation6], 128, 128, 8
    $region9: #{tpu_custom_call.1} parent=1 // pred_fallthru
      _
    // Predicated region
    $region10: #{tpu_custom_call.1} parent=1 // pred_check
      _
    $region11: #{tpu_custom_call.1} parent=1 // pred_check_branch
      %49 = sbr.rel (0) target = $region13
    $region12: #{tpu_custom_call.1} parent=1 // pred_region
      %50 = dma.done [#allocation3], 256
    $region13: #{tpu_custom_call.1} parent=1 // pred_fallthru
      _
    // Predicated region
    $region14: #{tpu_custom_call.1} parent=1 // pred_check
      _
    $region15: #{tpu_custom_call.1} parent=1 // pred_check_branch
      %52 = sbr.rel (0) target = $region17
    $region16: #{tpu_custom_call.1} parent=1 // pred_region
      %53 = dma.done [#allocation6], 256
    $region17: #{tpu_custom_call.1} parent=1 // pred_fallthru
      _
    %s54 = sadd.s32 0, 0
    %p55 = scmp.lt.s32.totalorder %s54, 1
    %s56 = ssub.s32 %s54, 1
    %s57 = scalar_select %p55, %s54, %s56
    %s58 = smul.u32 2, %s57
    %s59 = sadd.s32 0, 0
    %p60 = scmp.lt.s32.totalorder %s59, 1
    %s61 = ssub.s32 %s59, 1
    %s62 = scalar_select %p60, %s59, %s61
    %s63 = smul.u32 2, %s62
    %p64 = scmp.eq.s32.totalorder 0, 0
    // Predicated region
    $region18: #{tpu_custom_call.1} parent=1 // pred_check
      %p65 = pneg %p64
    $region19: #{tpu_custom_call.1} parent=1 // pred_check_branch
      %67 = sbr.rel (%p65) target = $region21
    $region20: #{tpu_custom_call.1} parent=1 // pred_region
      %68 = vst [vmem:[#allocation7] sm:$0xff] 0.0
    $region21: #{tpu_custom_call.1} parent=1 // pred_fallthru
      _
    %s69 = sadd.s32 0, 0
    %s70 = smul.u32 %s69, 16
    %s71 = sadd.s32 %s70, 16
    %p72 = scmp.le.s32.totalorder %s71, 16
    // Predicated region
    $region22: #{tpu_custom_call.1} parent=1 // pred_check
      %p73 = pneg %p72
    $region23: #{tpu_custom_call.1} parent=1 // pred_check_branch
      %75 = sbr.rel (%p73) target = $region25
    $region24: #{tpu_custom_call.1} parent=1 // pred_region
      %v76 = vld [vmem:[#allocation7] sm:$0xff]
      %v77 = vld [vmem:[#allocation2] sm:$0xff]
      %v78 = vld [vmem:[#allocation2 + $0x8] sm:$0xff]
      %v79 = vld [vmem:[#allocation5] sm:$0xff]
      %v80 = vld [vmem:[#allocation5 + $0x8] sm:$0xff]
      %v81 = vsub.f32 %v77, %v79
      %v82 = vsub.f32 %v78, %v80
      %v83 = vand.u32 2147483647, %v81
      %v84 = vand.u32 2147483647, %v82
      %v85 = vadd.f32 %v83, %v84
      %v86 = vadd.f32 %v85, 0.0
      %v87 = vadd.f32 %v76, %v86
      %88 = vst [vmem:[#allocation7] sm:$0xff] %v87
    $region25: #{tpu_custom_call.1} parent=1 // pred_fallthru
      _
    %p89 = scmp.gt.s32.totalorder %s71, 16
    // Predicated region
    $region26: #{tpu_custom_call.1} parent=1 // pred_check
      %p90 = pneg %p89
    $region27: #{tpu_custom_call.1} parent=1 // pred_check_branch
      %92 = sbr.rel (%p90) target = $region29
    $region28: #{tpu_custom_call.1} parent=1 // pred_region
      %v93 = vld [vmem:[#allocation7] sm:$0xff]
      %v94 = vld [vmem:[#allocation2] sm:$0xff]
      %v95 = vld [vmem:[#allocation2 + $0x8] sm:$0xff]
      %v96 = vld [vmem:[#allocation5] sm:$0xff]
      %v97 = vld [vmem:[#allocation5 + $0x8] sm:$0xff]
      %v98 = vsub.f32 %v94, %v96
      %v99 = vsub.f32 %v95, %v97
      %v100 = vand.u32 2147483647, %v98
      %v101 = vand.u32 2147483647, %v99
      %v102 = vlaneseq
      %v103 = vshrl.u32 %v102, 7
      %v104 = vadd.s32 %v103, 8
      %v105 = vstv %s70
      %v106 = vadd.s32 %v105, %v103
      %v107 = vadd.s32 %v105, %v104
      %vm108 = vcmp.lt.s32.totalorder %v106, 16
      %vm109 = vcmp.lt.s32.totalorder %v107, 16
      %v110 = vsel %vm108, %v100, 0.0
      %v111 = vsel %vm109, %v101, 0.0
      %v112 = vadd.f32 %v110, %v111
      %v113 = vadd.f32 %v112, 0.0
      %v114 = vadd.f32 %v93, %v113
      %115 = vst [vmem:[#allocation7] sm:$0xff] %v114
    $region29: #{tpu_custom_call.1} parent=1 // pred_fallthru
      _
    // Predicated region
    $region30: #{tpu_custom_call.1} parent=1 // pred_check
      _
    $region31: #{tpu_custom_call.1} parent=1 // pred_check_branch
      %117 = sbr.rel (0) target = $region33
    $region32: #{tpu_custom_call.1} parent=1 // pred_region
      %s119 = ssub.s32 128, 128
      %120 = vsyncadd [#allocation4], %s119
      %s122 = sshll.u32 [#allocation7], 4
      %s123 = int_to_ptr.vmem [resolvable:$true] %s122
      %125 = dma.vmem_to_hbm [thread:$0]  %s123, 128, %s2, [#allocation4]
    $region33: #{tpu_custom_call.1} parent=1 // pred_fallthru
      _
    // Predicated region
    $region34: #{tpu_custom_call.1} parent=1 // pred_check
      _
    $region35: #{tpu_custom_call.1} parent=1 // pred_check_branch
      %127 = sbr.rel (0) target = $region37
    $region36: #{tpu_custom_call.1} parent=1 // pred_region
      %128 = dma.done [#allocation4], 128
    $region37: #{tpu_custom_call.1} parent=1 // pred_fallthru
      _
    %129 = vsyncpa [#allocation3], 1
    %130 = vsyncpa [#allocation6], 1
    %131 = vsyncpa [#allocation4], 1

</llo_original>
